<compile_context>
chip_gen: v5e
topology: v5e:2x2
jax: 0.10.0
libtpu: 0.0.40
codegen_flags: <defaults>
</compile_context>

<pallas_src>
import jax
import jax.numpy as jnp
from jax.experimental import pallas as pl
from jax.experimental.pallas import tpu as pltpu


def _f2dagg_kernel(fe_ref, e_ref, x_ref,
                   waA_ref, waC_ref, wpF_ref, wpX_ref, bp_ref, ba_ref,
                   out_ref):
    """One grid step = Bt batch elements, fully resident in VMEM."""
    Bt, N, _ = fe_ref.shape
    Fd = x_ref.shape[-1]
    out_p = out_ref.shape[-1]
    mm_dtype = e_ref.dtype                              # bf16 fast path / f32 reference

    # A is streamed at input width (bf16 on the fast path) and upcast ONCE; all
    # gate / degree / blend math stays in f32 per the accuracy note.
    A = fe_ref[...].astype(jnp.float32)                 # (Bt, N, N) f32
    E = e_ref[...]                                      # (Bt, N, N) matmul dtype

    # S = D^{-1/2} A D^{-1/2}  (rsqrt -> EUP slot, not pow's exp/log on the VALU)
    d_inv = jax.lax.rsqrt(jnp.sum(A, axis=-1))          # (Bt, N) f32
    S = A * d_inv[:, :, None] * d_inv[:, None, :]       # (Bt, N, N) f32

    # C = S @ E @ S^T : MXU chain in the matmul dtype, f32 accumulation, the
    # transpose folded into the contraction (no explicit S.T / extra VMEM temp).
    Sm = S.astype(mm_dtype)
    SE = jnp.einsum('bij,bjk->bik', Sm, E,
                    preferred_element_type=jnp.float32)
    C = jnp.einsum('bik,bjk->bij', SE.astype(mm_dtype), Sm,
                   preferred_element_type=jnp.float32)  # (Bt, N, N) f32

    # alpha = sigmoid(Linear(cat([A, C], -1))) as a VPU multiply + cross-lane
    # reduce in f32 (a 1-lane matmul would waste an MXU push); the weights arrive
    # pre-split / pre-transposed as (1, N) broadcast rows, the bias from SMEM.
    logit = jnp.sum(A * waA_ref[...] + C * waC_ref[...],
                    axis=-1, keepdims=True) + ba_ref[0]            # (Bt, N, 1)
    gate = jax.nn.sigmoid(logit)

    fe_new = gate * C + (1.0 - gate) * A                 # (Bt, N, N) f32 blend

    # distribution_node = LeakyReLU(Linear(cat([fe_new, X], -1)))
    # batch tile stacked into rows so each half runs as ONE (Bt*N, k) @ (k, out_p);
    # out_p is lane-padded in the wrapper so the store below is unmasked.
    X = x_ref[...].astype(jnp.float32)                   # (Bt, N, Fd) f32
    y = (jnp.dot(fe_new.reshape(Bt * N, N), wpF_ref[...],
                 preferred_element_type=jnp.float32)
         + jnp.dot(X.reshape(Bt * N, Fd), wpX_ref[...],
                   preferred_element_type=jnp.float32)
         + bp_ref[...])                                   # (Bt*N, out_p)
    y = jnp.where(y >= 0.0, y, 0.01 * y)                  # LeakyReLU(slope=0.01)

    out_ref[...] = y.reshape(Bt, N, out_p).astype(out_ref.dtype)


def _tpu_generation_info():
    """(physical VMEM bytes, default scoped VMEM bytes, # TensorCores per chip)."""
    vmem_physical = None
    try:
        vmem_physical = int(pltpu.get_tpu_info().vmem_capacity_bytes)
    except Exception:
        vmem_physical = None
    kind = ""
    try:
        kind = jax.devices()[0].device_kind.lower()
    except Exception:
        kind = ""
    is_v7 = ("v7" in kind) or ("7x" in kind) or ("tpu7" in kind)
    is_v5e = ("v5e" in kind) or ("v5 lite" in kind) or ("v5litepod" in kind)
    if vmem_physical is None:
        vmem_physical = (64 << 20) if is_v7 else (128 << 20)
    default_scoped = (16 << 20) if is_v5e else (32 << 20)   # v5e default is 16 MiB
    num_tc = 2 if is_v7 else 1                               # megacore sharding only on v7x
    return vmem_physical, default_scoped, num_tc


def _step_vmem_bytes(bt, N, F, out_p, in_bytes, e_bytes):
    """Per-grid-step VMEM footprint estimate (inputs double-buffered + temps)."""
    ins = 2 * bt * N * (N * in_bytes + N * e_bytes + F * in_bytes)  # A, E, X (x2 bufs)
    outs = 2 * bt * N * out_p * 4                                   # output (x2 bufs)
    f32_tmps = 6 * bt * N * N * 4        # A_f32, S, SE, C, fe_new + reshape-relayout slack
    mm_tmps = 2 * bt * N * N * e_bytes   # Sm, SE cast to matmul dtype
    y_tmp = bt * N * out_p * 4
    weights = 2 * (2 * N * 4 + (N + F) * out_p * 4 + out_p * 4)     # resident weight tiles
    return ins + outs + f32_tmps + mm_tmps + y_tmp + weights


def _pick_block_batch(B, N, F, out_p, in_bytes, e_bytes, vmem_budget, num_tc,
                      target_rows=256):
    """Batch elements per grid step: big enough to amortize step overhead and feed
    the MXU ~256 rows, small enough for the generation-aware VMEM budget, and on
    2-TC chips (v7x) leaving >= 2 grid points so the batch axis shards across
    both TensorCores."""
    bt = max(1, min(B, max(1, target_rows // max(N, 1))))
    while B % bt:
        bt -= 1
    while bt > 1 and _step_vmem_bytes(bt, N, F, out_p, in_bytes, e_bytes) > vmem_budget:
        bt -= 1
        while B % bt:
            bt -= 1
    if num_tc >= 2 and B >= 2 and B // bt < 2:
        bt = max(1, B // 2)
        while B % bt:
            bt -= 1
    return bt


def f2dagg_forward(feature_edge, distribution_node, associated_matrix,
                   w_alpha, b_alpha, w_p2d, b_p2d,
                   *, use_bf16_matmul=True, block_batch=None,
                   pad_output_lanes=True):
    B, N, N2 = feature_edge.shape
    assert N == N2
    F = distribution_node.shape[-1]
    in_c = N + F
    out_c = w_p2d.shape[1]
    assert w_alpha.shape == (in_c, 1) and w_p2d.shape == (in_c, out_c)
    # The alpha Linear (width 2N) and the p2d Linear (width N+F) share in_c,
    # which forces F == N exactly as in the PyTorch module.
    assert F == N

    mm_dtype = jnp.bfloat16 if use_bf16_matmul else jnp.float32
    in_dtype = jnp.bfloat16 if use_bf16_matmul else jnp.float32
    e_bytes = jnp.dtype(mm_dtype).itemsize
    in_bytes = jnp.dtype(in_dtype).itemsize

    # HBM->VMEM streams at 2 bytes/elem on the fast path (kernel is HBM-bound);
    # the kernel upcasts A to f32 for the degree / gate / blend math.
    fe = feature_edge.astype(in_dtype)
    x = distribution_node.astype(in_dtype)
    # associated_edge[assoc > 0] = 1 (non-positive entries keep their value),
    # done once in the wrapper; narrow dtype halves its HBM->VMEM DMA bytes.
    assoc_edge = jnp.where(associated_matrix > 0, 1.0,
                           associated_matrix).astype(mm_dtype)

    # Lane-dense output: pad out_c to a full 128-lane multiple so output stores
    # are unmasked vst (biggest single out_spec lever); pure layout plumbing.
    if pad_output_lanes:
        out_p = max(128, ((out_c + 127) // 128) * 128)
    else:
        out_p = out_c
    pad = out_p - out_c

    # Pre-split the "concatenated" Linear weights so the kernel never slices
    # VMEM-resident weights (in-kernel slices materialize per-step copies).
    wa_A = w_alpha[:N, 0].reshape(1, N).astype(jnp.float32)
    wa_C = w_alpha[N:, 0].reshape(1, N).astype(jnp.float32)
    wp_fe = w_p2d[:N, :].astype(jnp.float32)
    wp_x = w_p2d[N:, :].astype(jnp.float32)
    b_p = b_p2d.reshape(1, out_c).astype(jnp.float32)
    if pad:
        wp_fe = jnp.pad(wp_fe, ((0, 0), (0, pad)))
        wp_x = jnp.pad(wp_x, ((0, 0), (0, pad)))
        b_p = jnp.pad(b_p, ((0, 0), (0, pad)))
    b_a = b_alpha.reshape(1).astype(jnp.float32)          # scalar -> SMEM

    vmem_physical, default_scoped, num_tc = _tpu_generation_info()
    # ~60% of physical VMEM, capped: ~77 MiB on 128 MiB chips (v5e/v6e),
    # ~38 MiB on 64 MiB chips (v7x) — leaves room for compiler-internal scratch.
    vmem_budget = min(int(0.6 * vmem_physical), 96 << 20)

    Bt = block_batch if block_batch is not None else _pick_block_batch(
        B, N, F, out_p, in_bytes, e_bytes, vmem_budget, num_tc)
    assert B % Bt == 0, f"block_batch={Bt} must divide B={B}"

    step_bytes = _step_vmem_bytes(Bt, N, F, out_p, in_bytes, e_bytes)
    cp_kwargs = dict(dimension_semantics=("parallel",))
    need = step_bytes + (4 << 20)                         # headroom for compiler scratch
    if need > default_scoped:                             # v5e default is only 16 MiB
        cp_kwargs["vmem_limit_bytes"] = int(min(need, vmem_physical))
    # TODO(synk): for N large enough that whole (N, N) f32 tiles no longer fit the
    # budget above, the S @ E @ S^T chain needs a K-tiled accumulator loop.

    out = pl.pallas_call(
        _f2dagg_kernel,
        out_shape=jax.ShapeDtypeStruct((B, N, out_p), jnp.float32),
        grid_spec=pltpu.PrefetchScalarGridSpec(
            num_scalar_prefetch=0,
            grid=(B // Bt,),
            in_specs=[
                pl.BlockSpec((Bt, N, N), lambda b: (b, 0, 0)),      # feature_edge (narrow)
                pl.BlockSpec((Bt, N, N), lambda b: (b, 0, 0)),      # binarized assoc edge
                pl.BlockSpec((Bt, N, F), lambda b: (b, 0, 0)),      # distribution_node
                pl.BlockSpec((1, N), lambda b: (0, 0)),             # alpha weight, A half
                pl.BlockSpec((1, N), lambda b: (0, 0)),             # alpha weight, C half
                pl.BlockSpec((N, out_p), lambda b: (0, 0)),         # p2d weight, fe half
                pl.BlockSpec((F, out_p), lambda b: (0, 0)),         # p2d weight, X half
                pl.BlockSpec((1, out_p), lambda b: (0, 0)),         # p2d bias (lane-padded)
                pl.BlockSpec(memory_space=pltpu.MemorySpace.SMEM),  # alpha bias scalar
            ],
            out_specs=pl.BlockSpec((Bt, N, out_p), lambda b: (b, 0, 0)),
        ),
        compiler_params=pltpu.CompilerParams(**cp_kwargs),
    )(fe, assoc_edge, x, wa_A, wa_C, wp_fe, wp_x, b_p, b_a)

    if pad:
        out = out[..., :out_c]
    return out


def _reference(feature_edge, distribution_node, associated_matrix,
               w_alpha, b_alpha, w_p2d, b_p2d):
    """Plain-JAX mirror of the PyTorch forward (for sanity checking)."""
    E = jnp.where(associated_matrix > 0, 1.0, associated_matrix)
    d = jnp.sum(feature_edge, axis=-1)
    d_inv = jnp.power(d, -0.5)
    S = feature_edge * d_inv[:, :, None] * d_inv[:, None, :]
    C = jnp.einsum('bij,bjk,blk->bil', S, E, S)
    cat1 = jnp.concatenate([feature_edge, C], axis=-1)
    a = jax.nn.sigmoid(cat1 @ w_alpha + b_alpha)
    fe = a * C + (1.0 - a) * feature_edge
    cat2 = jnp.concatenate([fe, distribution_node], axis=-1)
    y = cat2 @ w_p2d + b_p2d
    return jnp.where(y >= 0.0, y, 0.01 * y)


if __name__ == "__main__":
    B, N, out_c = 4, 16, 32
    F = N                      # module forces N + F == in_c == 2N
    in_c = N + F

    key = jax.random.PRNGKey(0)
    k1, k2, k3, k4, k5, k6, k7 = jax.random.split(key, 7)

    # strictly positive feature_edge so row sums are > 0 (D^{-1/2} well-defined)
    feature_edge = jax.random.uniform(k1, (B, N, N), jnp.float32,
                                      minval=0.1, maxval=1.0)
    distribution_node = jax.random.normal(k2, (B, N, F), jnp.float32)
    associated_matrix = jax.random.uniform(k3, (B, N, N), jnp.float32) - 0.5

    # deterministic synthetic "Linear" parameters
    bound = 1.0 / (in_c ** 0.5)
    w_alpha = jax.random.uniform(k4, (in_c, 1), jnp.float32,
                                 minval=-bound, maxval=bound)
    b_alpha = jax.random.uniform(k5, (1,), jnp.float32,
                                 minval=-bound, maxval=bound)
    w_p2d = jax.random.uniform(k6, (in_c, out_c), jnp.float32,
                               minval=-bound, maxval=bound)
    b_p2d = jax.random.uniform(k7, (out_c,), jnp.float32,
                               minval=-bound, maxval=bound)

    ref = _reference(feature_edge, distribution_node, associated_matrix,
                     w_alpha, b_alpha, w_p2d, b_p2d)

    # f32 reference path (exact math, tight tolerance)
    out_f32 = jax.block_until_ready(
        f2dagg_forward(feature_edge, distribution_node, associated_matrix,
                       w_alpha, b_alpha, w_p2d, b_p2d,
                       use_bf16_matmul=False))
    assert out_f32.shape == (B, N, out_c)
    assert jnp.allclose(out_f32, ref, atol=1e-3, rtol=1e-3)

    # bf16 fast path: bf16 HBM streams + bf16 MXU chain, f32 accumulation / gate
    out_bf16 = jax.block_until_ready(
        f2dagg_forward(feature_edge, distribution_node, associated_matrix,
                       w_alpha, b_alpha, w_p2d, b_p2d,
                       use_bf16_matmul=True))
    assert out_bf16.shape == (B, N, out_c)
    assert jnp.allclose(out_bf16, ref, atol=8e-2, rtol=8e-2)

    print("KERNEL_OK")
</pallas_src>

<mosaic_0001>
module attributes {stable_mosaic.version = 11 : i64} {
  func.func @_f2dagg_kernel(%arg0: i32, %arg1: memref<4x16x16xf32, #tpu.memory_space<vmem>>, %arg2: memref<4x16x16xf32, #tpu.memory_space<vmem>>, %arg3: memref<4x16x16xf32, #tpu.memory_space<vmem>>, %arg4: memref<1x16xf32, #tpu.memory_space<vmem>>, %arg5: memref<1x16xf32, #tpu.memory_space<vmem>>, %arg6: memref<16x128xf32, #tpu.memory_space<vmem>>, %arg7: memref<16x128xf32, #tpu.memory_space<vmem>>, %arg8: memref<1x128xf32, #tpu.memory_space<vmem>>, %arg9: memref<1xf32, #tpu.memory_space<smem>>, %arg10: memref<4x16x128xf32, #tpu.memory_space<vmem>>) attributes {dimension_semantics = [#tpu.dimension_semantics<parallel>], iteration_bounds = array<i64: 1>, scalar_prefetch = 0 : i64, scratch_operands = 0 : i64, tpu.core_type = #tpu.core_type<tc>, window_params = [{transform_indices = @transform_0, window_bounds = array<i64: 4, 16, 16>}, {transform_indices = @transform_1, window_bounds = array<i64: 4, 16, 16>}, {transform_indices = @transform_2, window_bounds = array<i64: 4, 16, 16>}, {pipeline_mode = #tpu.pipeline_mode<synchronous>, transform_indices = @transform_3, window_bounds = array<i64: 1, 16>}, {pipeline_mode = #tpu.pipeline_mode<synchronous>, transform_indices = @transform_4, window_bounds = array<i64: 1, 16>}, {pipeline_mode = #tpu.pipeline_mode<synchronous>, transform_indices = @transform_5, window_bounds = array<i64: 16, 128>}, {pipeline_mode = #tpu.pipeline_mode<synchronous>, transform_indices = @transform_6, window_bounds = array<i64: 16, 128>}, {pipeline_mode = #tpu.pipeline_mode<synchronous>, transform_indices = @transform_7, window_bounds = array<i64: 1, 128>}, {transform_indices = @transform_8, window_bounds = array<i64: 1>}, {transform_indices = @transform_9, window_bounds = array<i64: 4, 16, 128>}]} {
    %c0 = arith.constant 0 : index
    %c0_0 = arith.constant 0 : index
    %c0_1 = arith.constant 0 : index
    %0 = vector.load %arg1[%c0, %c0_0, %c0_1] : memref<4x16x16xf32, #tpu.memory_space<vmem>>, vector<4x16x16xf32>
    %c0_2 = arith.constant 0 : index
    %c0_3 = arith.constant 0 : index
    %c0_4 = arith.constant 0 : index
    %1 = vector.load %arg2[%c0_2, %c0_3, %c0_4] : memref<4x16x16xf32, #tpu.memory_space<vmem>>, vector<4x16x16xf32>
    %cst = arith.constant dense<0.000000e+00> : vector<4x16xf32>
    %2 = vector.multi_reduction <add>, %0, %cst [2] : vector<4x16x16xf32> to vector<4x16xf32>
    %3 = math.rsqrt %2 : vector<4x16xf32>
    %4 = vector.shape_cast %3 : vector<4x16xf32> to vector<4x16x1xf32>
    %5 = vector.broadcast %4 : vector<4x16x1xf32> to vector<4x16x16xf32>
    %6 = arith.mulf %0, %5 : vector<4x16x16xf32>
    %7 = vector.shape_cast %3 : vector<4x16xf32> to vector<4x1x16xf32>
    %8 = vector.broadcast %7 : vector<4x1x16xf32> to vector<4x16x16xf32>
    %9 = arith.mulf %6, %8 : vector<4x16x16xf32>
    "tpu.trace_start"() <{level = 10 : i32, message = "bij,bjk->bik"}> : () -> ()
    %cst_5 = arith.constant dense<0.000000e+00> : vector<4x16x16xf32>
    %10 = tpu.matmul %9, %1, %cst_5 {dimension_numbers = #tpu.dot_dimension_numbers<[2], [1], [1], [2], [0, 0, 0, 1, 1, 2], [0], [0]>} : vector<4x16x16xf32>, vector<4x16x16xf32>, vector<4x16x16xf32> -> vector<4x16x16xf32>
    "tpu.trace_stop"() : () -> ()
    "tpu.trace_start"() <{level = 10 : i32, message = "bik,bjk->bij"}> : () -> ()
    %cst_6 = arith.constant dense<0.000000e+00> : vector<4x16x16xf32>
    %11 = tpu.matmul %10, %9, %cst_6 {dimension_numbers = #tpu.dot_dimension_numbers<[2], [2], [1], [1], [0, 0, 0, 1, 1, 1], [0], [0]>} : vector<4x16x16xf32>, vector<4x16x16xf32>, vector<4x16x16xf32> -> vector<4x16x16xf32>
    "tpu.trace_stop"() : () -> ()
    %c0_7 = arith.constant 0 : index
    %c0_8 = arith.constant 0 : index
    %12 = vector.load %arg4[%c0_7, %c0_8] : memref<1x16xf32, #tpu.memory_space<vmem>>, vector<1x16xf32>
    %13 = vector.shape_cast %12 : vector<1x16xf32> to vector<1x1x16xf32>
    %14 = vector.broadcast %13 : vector<1x1x16xf32> to vector<4x16x16xf32>
    %15 = arith.mulf %0, %14 : vector<4x16x16xf32>
    %c0_9 = arith.constant 0 : index
    %c0_10 = arith.constant 0 : index
    %16 = vector.load %arg5[%c0_9, %c0_10] : memref<1x16xf32, #tpu.memory_space<vmem>>, vector<1x16xf32>
    %17 = vector.shape_cast %16 : vector<1x16xf32> to vector<1x1x16xf32>
    %18 = vector.broadcast %17 : vector<1x1x16xf32> to vector<4x16x16xf32>
    %19 = arith.mulf %11, %18 : vector<4x16x16xf32>
    %20 = arith.addf %15, %19 : vector<4x16x16xf32>
    %cst_11 = arith.constant dense<0.000000e+00> : vector<4x16xf32>
    %21 = vector.multi_reduction <add>, %20, %cst_11 [2] : vector<4x16x16xf32> to vector<4x16xf32>
    %22 = vector.shape_cast %21 : vector<4x16xf32> to vector<4x16x1xf32>
    %c0_12 = arith.constant 0 : index
    %23 = memref.load %arg9[%c0_12] : memref<1xf32, #tpu.memory_space<smem>>
    %24 = vector.broadcast %23 : f32 to vector<4x16x1xf32>
    %25 = arith.addf %22, %24 : vector<4x16x1xf32>
    %26 = arith.negf %25 : vector<4x16x1xf32>
    %27 = math.exp %26 : vector<4x16x1xf32>
    %cst_13 = arith.constant 1.000000e+00 : f32
    %28 = vector.broadcast %cst_13 : f32 to vector<4x16x1xf32>
    %29 = arith.addf %28, %27 : vector<4x16x1xf32>
    %30 = arith.divf %28, %29 : vector<4x16x1xf32>
    %31 = vector.broadcast %30 : vector<4x16x1xf32> to vector<4x16x16xf32>
    %32 = arith.mulf %31, %11 : vector<4x16x16xf32>
    %cst_14 = arith.constant 1.000000e+00 : f32
    %33 = vector.broadcast %cst_14 : f32 to vector<4x16x1xf32>
    %34 = arith.subf %33, %30 : vector<4x16x1xf32>
    %35 = vector.broadcast %34 : vector<4x16x1xf32> to vector<4x16x16xf32>
    %36 = arith.mulf %35, %0 : vector<4x16x16xf32>
    %37 = arith.addf %32, %36 : vector<4x16x16xf32>
    %c0_15 = arith.constant 0 : index
    %c0_16 = arith.constant 0 : index
    %c0_17 = arith.constant 0 : index
    %38 = vector.load %arg3[%c0_15, %c0_16, %c0_17] : memref<4x16x16xf32, #tpu.memory_space<vmem>>, vector<4x16x16xf32>
    %39 = vector.shape_cast %37 : vector<4x16x16xf32> to vector<64x16xf32>
    %c0_18 = arith.constant 0 : index
    %c0_19 = arith.constant 0 : index
    %40 = vector.load %arg6[%c0_18, %c0_19] : memref<16x128xf32, #tpu.memory_space<vmem>>, vector<16x128xf32>
    %cst_20 = arith.constant dense<0.000000e+00> : vector<64x128xf32>
    %41 = tpu.matmul %39, %40, %cst_20 {dimension_numbers = #tpu.dot_dimension_numbers<[1], [0], [0], [1], [0, 0, 1, 1], [], []>} : vector<64x16xf32>, vector<16x128xf32>, vector<64x128xf32> -> vector<64x128xf32>
    %42 = vector.shape_cast %38 : vector<4x16x16xf32> to vector<64x16xf32>
    %c0_21 = arith.constant 0 : index
    %c0_22 = arith.constant 0 : index
    %43 = vector.load %arg7[%c0_21, %c0_22] : memref<16x128xf32, #tpu.memory_space<vmem>>, vector<16x128xf32>
    %cst_23 = arith.constant dense<0.000000e+00> : vector<64x128xf32>
    %44 = tpu.matmul %42, %43, %cst_23 {dimension_numbers = #tpu.dot_dimension_numbers<[1], [0], [0], [1], [0, 0, 1, 1], [], []>} : vector<64x16xf32>, vector<16x128xf32>, vector<64x128xf32> -> vector<64x128xf32>
    %45 = arith.addf %41, %44 : vector<64x128xf32>
    %c0_24 = arith.constant 0 : index
    %c0_25 = arith.constant 0 : index
    %46 = vector.load %arg8[%c0_24, %c0_25] : memref<1x128xf32, #tpu.memory_space<vmem>>, vector<1x128xf32>
    %47 = vector.broadcast %46 : vector<1x128xf32> to vector<64x128xf32>
    %48 = arith.addf %45, %47 : vector<64x128xf32>
    %cst_26 = arith.constant 0.000000e+00 : f32
    %49 = vector.broadcast %cst_26 : f32 to vector<64x128xf32>
    %50 = arith.cmpf oge, %48, %49 : vector<64x128xf32>
    %cst_27 = arith.constant 0.00999999977 : f32
    %51 = vector.broadcast %cst_27 : f32 to vector<64x128xf32>
    %52 = arith.mulf %51, %48 : vector<64x128xf32>
    %53 = arith.select %50, %48, %52 : vector<64x128xi1>, vector<64x128xf32>
    %54 = vector.shape_cast %53 : vector<64x128xf32> to vector<4x16x128xf32>
    %c0_28 = arith.constant 0 : index
    %c0_29 = arith.constant 0 : index
    %c0_30 = arith.constant 0 : index
    %55 = vector.load %arg10[%c0_28, %c0_29, %c0_30] : memref<4x16x128xf32, #tpu.memory_space<vmem>>, vector<4x16x128xf32>
    tpu.vector_store %arg10[%c0_28, %c0_29, %c0_30], %54 {strides = array<i32>} : memref<4x16x128xf32, #tpu.memory_space<vmem>>, vector<4x16x128xf32>,
    return
  }
  func.func @transform_0(%arg0: i32) -> (i32, i32, i32) {
    %c0_i32 = arith.constant 0 : i32
    %c0_i32_0 = arith.constant 0 : i32
    %c0_i32_1 = arith.constant 0 : i32
    return %arg0, %c0_i32, %c0_i32_0 : i32, i32, i32
  }
  func.func @transform_1(%arg0: i32) -> (i32, i32, i32) {
    %c0_i32 = arith.constant 0 : i32
    %c0_i32_0 = arith.constant 0 : i32
    %c0_i32_1 = arith.constant 0 : i32
    return %arg0, %c0_i32, %c0_i32_0 : i32, i32, i32
  }
  func.func @transform_2(%arg0: i32) -> (i32, i32, i32) {
    %c0_i32 = arith.constant 0 : i32
    %c0_i32_0 = arith.constant 0 : i32
    %c0_i32_1 = arith.constant 0 : i32
    return %arg0, %c0_i32, %c0_i32_0 : i32, i32, i32
  }
  func.func @transform_3(%arg0: i32) -> (i32, i32) {
    %c0_i32 = arith.constant 0 : i32
    %c0_i32_0 = arith.constant 0 : i32
    %c0_i32_1 = arith.constant 0 : i32
    return %c0_i32, %c0_i32_0 : i32, i32
  }
  func.func @transform_4(%arg0: i32) -> (i32, i32) {
    %c0_i32 = arith.constant 0 : i32
    %c0_i32_0 = arith.constant 0 : i32
    %c0_i32_1 = arith.constant 0 : i32
    return %c0_i32, %c0_i32_0 : i32, i32
  }
  func.func @transform_5(%arg0: i32) -> (i32, i32) {
    %c0_i32 = arith.constant 0 : i32
    %c0_i32_0 = arith.constant 0 : i32
    %c0_i32_1 = arith.constant 0 : i32
    return %c0_i32, %c0_i32_0 : i32, i32
  }
  func.func @transform_6(%arg0: i32) -> (i32, i32) {
    %c0_i32 = arith.constant 0 : i32
    %c0_i32_0 = arith.constant 0 : i32
    %c0_i32_1 = arith.constant 0 : i32
    return %c0_i32, %c0_i32_0 : i32, i32
  }
  func.func @transform_7(%arg0: i32) -> (i32, i32) {
    %c0_i32 = arith.constant 0 : i32
    %c0_i32_0 = arith.constant 0 : i32
    %c0_i32_1 = arith.constant 0 : i32
    return %c0_i32, %c0_i32_0 : i32, i32
  }
  func.func @transform_8(%arg0: i32) -> i32 {
    %c0_i32 = arith.constant 0 : i32
    %c0_i32_0 = arith.constant 0 : i32
    return %c0_i32 : i32
  }
  func.func @transform_9(%arg0: i32) -> (i32, i32, i32) {
    %c0_i32 = arith.constant 0 : i32
    %c0_i32_0 = arith.constant 0 : i32
    %c0_i32_1 = arith.constant 0 : i32
    return %arg0, %c0_i32, %c0_i32_0 : i32, i32, i32
  }
}

</mosaic_0001>

<llo_original>
// kernel: tpu_custom_call.1
$region0: #{tpu_custom_call.1}
  #allocation0 [shape = 'u32[]', space=smem, size = 0x4, offset = 0x4, fixed_abs, tag = 'smem constant byte address 0x4 - core index']
  #allocation1 [shape = 'u32[72,128]{1,0:T(1,128)}', space=vmem, size = 0x9000, scoped, tag = 'internal scratch']
  #allocation2 [shape = 'f32[1]{0:T(128)S(6)}', space=smem, size = 0x200, scoped, tag = 'scoped memory for tpu_custom_call.1']
  %s0 = inlined_call_operand.hbm [shape: f32[4,16,16], index: 0, kind: input, shape index: {}]
  %s1 = inlined_call_operand.hbm [shape: f32[4,16,16], index: 1, kind: input, shape index: {}]
  %s2 = inlined_call_operand.hbm [shape: f32[4,16,16], index: 2, kind: input, shape index: {}]
  %s3 = inlined_call_operand.vmem [shape: f32[1,16], index: 3, kind: input, shape index: {}]
  %s4 = inlined_call_operand.vmem [shape: f32[1,16], index: 4, kind: input, shape index: {}]
  %s5 = inlined_call_operand.hbm [shape: f32[16,128], index: 5, kind: input, shape index: {}]
  %s6 = inlined_call_operand.hbm [shape: f32[16,128], index: 6, kind: input, shape index: {}]
  %s7 = inlined_call_operand.vmem [shape: f32[1,128], index: 7, kind: input, shape index: {}]
  %s8 = inlined_call_operand.<no memory space> [shape: f32[1], index: 8, kind: input, shape index: {}]
  %s9 = inlined_call_operand.hbm [shape: f32[4,16,128], index: 9, kind: output, shape index: {}]
  %s10 = sld [smem:[#allocation0]]
  $region66: #{tpu_custom_call.1} parent=0
    _
  %s12 = ssub.s32 1, %s10
  %s13 = scalar_select 0, %s12, %s10
  %14 = sst [smem:[#allocation2]] %s8
  $region1: #{tpu_custom_call.1} parent=0
    #allocation3 [shape = 'u8[32768]{0}', space=vmem, size = 0x8000, scoped, tag = 'input window, operand 0, single buffered']
    #allocation4 [shape = 's32[1]{0}', space=sflag, size = 0x4, scoped, tag = 'scoped memory for tpu_custom_call.1']
    #allocation5 [shape = 's32[1]{0}', space=sflag, size = 0x4, scoped, tag = 'scoped memory for tpu_custom_call.1']
    #allocation6 [shape = 'u8[32768]{0}', space=vmem, size = 0x8000, scoped, tag = 'input window, operand 1, single buffered']
    #allocation7 [shape = 's32[1]{0}', space=sflag, size = 0x4, scoped, tag = 'scoped memory for tpu_custom_call.1']
    #allocation8 [shape = 'u8[32768]{0}', space=vmem, size = 0x8000, scoped, tag = 'input window, operand 2, single buffered']
    #allocation9 [shape = 'u8[8192]{0}', space=vmem, size = 0x2000, scoped, tag = 'input window, operand 5, single buffered']
    #allocation10 [shape = 's32[1]{0}', space=sflag, size = 0x4, scoped, tag = 'scoped memory for tpu_custom_call.1']
    #allocation11 [shape = 'u8[8192]{0}', space=vmem, size = 0x2000, scoped, tag = 'input window, operand 6, single buffered']
    #allocation12 [shape = 'u8[32768]{0}', space=vmem, size = 0x8000, scoped, tag = 'output window, operand 0, single buffered']
    %15 = vsyncpa [#allocation4], 0
    %16 = vsyncpa [#allocation7], 0
    %17 = vsyncpa [#allocation10], 0
    %18 = vsyncpa [#allocation5], 0
    // Predicated region
    $region2: #{tpu_custom_call.1} parent=1 // pred_check
      _
    $region3: #{tpu_custom_call.1} parent=1 // pred_check_branch
      %20 = sbr.rel (0) target = $region5
    $region4: #{tpu_custom_call.1} parent=1 // pred_region
      %22 = vsyncadd [#allocation4], 0
      %s23 = sshll.u32 %s0, 4
      %s24 = int_to_ptr.hbm [resolvable:$true] %s23
      %s25 = sshll.u32 [#allocation3], 4
      %s26 = int_to_ptr.vmem [resolvable:$true] %s25
      %31 = dma.hbm_to_vmem [thread:$0]  %s24, 1024, %s26, [#allocation4], 128, 128, 8
    $region5: #{tpu_custom_call.1} parent=1 // pred_fallthru
      _
    // Predicated region
    $region6: #{tpu_custom_call.1} parent=1 // pred_check
      _
    $region7: #{tpu_custom_call.1} parent=1 // pred_check_branch
      %33 = sbr.rel (0) target = $region9
    $region8: #{tpu_custom_call.1} parent=1 // pred_region
      %35 = vsyncadd [#allocation7], 0
      %s36 = sshll.u32 %s1, 4
      %s37 = int_to_ptr.hbm [resolvable:$true] %s36
      %s38 = sshll.u32 [#allocation6], 4
      %s39 = int_to_ptr.vmem [resolvable:$true] %s38
      %44 = dma.hbm_to_vmem [thread:$0]  %s37, 1024, %s39, [#allocation7], 128, 128, 8
    $region9: #{tpu_custom_call.1} parent=1 // pred_fallthru
      _
    // Predicated region
    $region10: #{tpu_custom_call.1} parent=1 // pred_check
      _
    $region11: #{tpu_custom_call.1} parent=1 // pred_check_branch
      %46 = sbr.rel (0) target = $region13
    $region12: #{tpu_custom_call.1} parent=1 // pred_region
      %48 = vsyncadd [#allocation7], 0
      %s49 = sshll.u32 %s2, 4
      %s50 = int_to_ptr.hbm [resolvable:$true] %s49
      %s51 = sshll.u32 [#allocation8], 4
      %s52 = int_to_ptr.vmem [resolvable:$true] %s51
      %57 = dma.hbm_to_vmem [thread:$0]  %s50, 1024, %s52, [#allocation7], 128, 128, 8
    $region13: #{tpu_custom_call.1} parent=1 // pred_fallthru
      _
    // Predicated region
    $region14: #{tpu_custom_call.1} parent=1 // pred_check
      _
    $region15: #{tpu_custom_call.1} parent=1 // pred_check_branch
      %59 = sbr.rel (0) target = $region17
    $region16: #{tpu_custom_call.1} parent=1 // pred_region
      _
    $region17: #{tpu_custom_call.1} parent=1 // pred_fallthru
      _
    // Predicated region
    $region18: #{tpu_custom_call.1} parent=1 // pred_check
      _
    $region19: #{tpu_custom_call.1} parent=1 // pred_check_branch
      %61 = sbr.rel (0) target = $region21
    $region20: #{tpu_custom_call.1} parent=1 // pred_region
      _
    $region21: #{tpu_custom_call.1} parent=1 // pred_fallthru
      _
    // Predicated region
    $region22: #{tpu_custom_call.1} parent=1 // pred_check
      _
    $region23: #{tpu_custom_call.1} parent=1 // pred_check_branch
      %63 = sbr.rel (0) target = $region25
    $region24: #{tpu_custom_call.1} parent=1 // pred_region
      %65 = vsyncadd [#allocation10], 0
      %s66 = sshll.u32 %s5, 4
      %s67 = int_to_ptr.hbm [resolvable:$true] %s66
      %s68 = sshll.u32 [#allocation9], 4
      %s69 = int_to_ptr.vmem [resolvable:$true] %s68
      %74 = dma.hbm_to_vmem [thread:$0]  %s67, 256, %s69, [#allocation10], 128, 128, 8
    $region25: #{tpu_custom_call.1} parent=1 // pred_fallthru
      _
    // Predicated region
    $region26: #{tpu_custom_call.1} parent=1 // pred_check
      _
    $region27: #{tpu_custom_call.1} parent=1 // pred_check_branch
      %76 = sbr.rel (0) target = $region29
    $region28: #{tpu_custom_call.1} parent=1 // pred_region
      %78 = vsyncadd [#allocation10], 0
      %s79 = sshll.u32 %s6, 4
      %s80 = int_to_ptr.hbm [resolvable:$true] %s79
      %s81 = sshll.u32 [#allocation11], 4
      %s82 = int_to_ptr.vmem [resolvable:$true] %s81
      %87 = dma.hbm_to_vmem [thread:$0]  %s80, 256, %s82, [#allocation10], 128, 128, 8
    $region29: #{tpu_custom_call.1} parent=1 // pred_fallthru
      _
    // Predicated region
    $region30: #{tpu_custom_call.1} parent=1 // pred_check
      _
    $region31: #{tpu_custom_call.1} parent=1 // pred_check_branch
      %89 = sbr.rel (0) target = $region33
    $region32: #{tpu_custom_call.1} parent=1 // pred_region
      _
    $region33: #{tpu_custom_call.1} parent=1 // pred_fallthru
      _
    // Predicated region
    $region34: #{tpu_custom_call.1} parent=1 // pred_check
      _
    $region35: #{tpu_custom_call.1} parent=1 // pred_check_branch
      %91 = sbr.rel (0) target = $region37
    $region36: #{tpu_custom_call.1} parent=1 // pred_region
      _
    $region37: #{tpu_custom_call.1} parent=1 // pred_fallthru
      _
    // Predicated region
    $region38: #{tpu_custom_call.1} parent=1 // pred_check
      _
    $region39: #{tpu_custom_call.1} parent=1 // pred_check_branch
      %93 = sbr.rel (0) target = $region41
    $region40: #{tpu_custom_call.1} parent=1 // pred_region
      %95 = dma.done [#allocation4], 1024
    $region41: #{tpu_custom_call.1} parent=1 // pred_fallthru
      _
    // Predicated region
    $region42: #{tpu_custom_call.1} parent=1 // pred_check
      _
    $region43: #{tpu_custom_call.1} parent=1 // pred_check_branch
      %97 = sbr.rel (0) target = $region45
    $region44: #{tpu_custom_call.1} parent=1 // pred_region
      %99 = dma.done [#allocation7], 1024
    $region45: #{tpu_custom_call.1} parent=1 // pred_fallthru
      _
    // Predicated region
    $region46: #{tpu_custom_call.1} parent=1 // pred_check
      _
    $region47: #{tpu_custom_call.1} parent=1 // pred_check_branch
      %101 = sbr.rel (0) target = $region49
    $region48: #{tpu_custom_call.1} parent=1 // pred_region
      %103 = dma.done [#allocation7], 1024
    $region49: #{tpu_custom_call.1} parent=1 // pred_fallthru
      _
    // Predicated region
    $region50: #{tpu_custom_call.1} parent=1 // pred_check
      _
    $region51: #{tpu_custom_call.1} parent=1 // pred_check_branch
      %105 = sbr.rel (0) target = $region53
    $region52: #{tpu_custom_call.1} parent=1 // pred_region
      %107 = dma.done [#allocation10], 256
    $region53: #{tpu_custom_call.1} parent=1 // pred_fallthru
      _
    // Predicated region
    $region54: #{tpu_custom_call.1} parent=1 // pred_check
      _
    $region55: #{tpu_custom_call.1} parent=1 // pred_check_branch
      %109 = sbr.rel (0) target = $region57
    $region56: #{tpu_custom_call.1} parent=1 // pred_region
      %111 = dma.done [#allocation10], 256
    $region57: #{tpu_custom_call.1} parent=1 // pred_fallthru
      _
    %v112 = vld [vmem:[#allocation3] sm:$0xff]
    %v113 = vld [vmem:[#allocation3 + $0x8] sm:$0xff]
    %v114 = vld [vmem:[#allocation3 + $0x10] sm:$0xff]
    %v115 = vld [vmem:[#allocation3 + $0x18] sm:$0xff]
    %v116 = vld [vmem:[#allocation3 + $0x20] sm:$0xff]
    %v117 = vld [vmem:[#allocation3 + $0x28] sm:$0xff]
    %v118 = vld [vmem:[#allocation3 + $0x30] sm:$0xff]
    %v119 = vld [vmem:[#allocation3 + $0x38] sm:$0xff]
    %v120 = vld [vmem:[#allocation6] sm:$0xff]
    %v121 = vld [vmem:[#allocation6 + $0x8] sm:$0xff]
    %v122 = vld [vmem:[#allocation6 + $0x10] sm:$0xff]
    %v123 = vld [vmem:[#allocation6 + $0x18] sm:$0xff]
    %v124 = vld [vmem:[#allocation6 + $0x20] sm:$0xff]
    %v125 = vld [vmem:[#allocation6 + $0x28] sm:$0xff]
    %v126 = vld [vmem:[#allocation6 + $0x30] sm:$0xff]
    %v127 = vld [vmem:[#allocation6 + $0x38] sm:$0xff]
    %vm128 = vcmask 130048
    %v129 = vsel %vm128, %v112, 0.0
    %130 = vadd.xlane.f32.xlu0 %v129
    %v131 = vpop.xlane.xlu0 %130
    %v132 = vsel %vm128, %v113, 0.0
    %133 = vadd.xlane.f32.xlu0 %v132
    %v134 = vpop.xlane.xlu0 %133
    %v135 = vsel %vm128, %v114, 0.0
    %136 = vadd.xlane.f32.xlu0 %v135
    %v137 = vpop.xlane.xlu0 %136
    %v138 = vsel %vm128, %v115, 0.0
    %139 = vadd.xlane.f32.xlu0 %v138
    %v140 = vpop.xlane.xlu0 %139
    %v141 = vsel %vm128, %v116, 0.0
    %142 = vadd.xlane.f32.xlu0 %v141
    %v143 = vpop.xlane.xlu0 %142
    %v144 = vsel %vm128, %v117, 0.0
    %145 = vadd.xlane.f32.xlu0 %v144
    %v146 = vpop.xlane.xlu0 %145
    %v147 = vsel %vm128, %v118, 0.0
    %148 = vadd.xlane.f32.xlu0 %v147
    %v149 = vpop.xlane.xlu0 %148
    %v150 = vsel %vm128, %v119, 0.0
    %151 = vadd.xlane.f32.xlu0 %v150
    %v152 = vpop.xlane.xlu0 %151
    %v153 = vrsqrt.pop %v131
    %v154 = vmul.f32 %v153, %v131
    %v155 = vmul.f32 %v154, %v153
    %v156 = vmul.f32 0.5, %v155
    %v157 = vsub.f32 1.5, %v156
    %v158 = vmul.f32 %v153, %v157
    %vm159 = vweird.f32 %v131
    %vm160 = vweird.f32 %v153
    %vm161 = vmor %vm159, %vm160
    %v162 = vsel %vm161, %v153, %v158
    %v163 = vrsqrt.pop %v134
    %v164 = vmul.f32 %v163, %v134
    %v165 = vmul.f32 %v164, %v163
    %v166 = vmul.f32 0.5, %v165
    %v167 = vsub.f32 1.5, %v166
    %v168 = vmul.f32 %v163, %v167
    %vm169 = vweird.f32 %v134
    %vm170 = vweird.f32 %v163
    %vm171 = vmor %vm169, %vm170
    %v172 = vsel %vm171, %v163, %v168
    %v173 = vrsqrt.pop %v137
    %v174 = vmul.f32 %v173, %v137
    %v175 = vmul.f32 %v174, %v173
    %v176 = vmul.f32 0.5, %v175
    %v177 = vsub.f32 1.5, %v176
    %v178 = vmul.f32 %v173, %v177
    %vm179 = vweird.f32 %v137
    %vm180 = vweird.f32 %v173
    %vm181 = vmor %vm179, %vm180
    %v182 = vsel %vm181, %v173, %v178
    %v183 = vrsqrt.pop %v140
    %v184 = vmul.f32 %v183, %v140
    %v185 = vmul.f32 %v184, %v183
    %v186 = vmul.f32 0.5, %v185
    %v187 = vsub.f32 1.5, %v186
    %v188 = vmul.f32 %v183, %v187
    %vm189 = vweird.f32 %v140
    %vm190 = vweird.f32 %v183
    %vm191 = vmor %vm189, %vm190
    %v192 = vsel %vm191, %v183, %v188
    %v193 = vrsqrt.pop %v143
    %v194 = vmul.f32 %v193, %v143
    %v195 = vmul.f32 %v194, %v193
    %v196 = vmul.f32 0.5, %v195
    %v197 = vsub.f32 1.5, %v196
    %v198 = vmul.f32 %v193, %v197
    %vm199 = vweird.f32 %v143
    %vm200 = vweird.f32 %v193
    %vm201 = vmor %vm199, %vm200
    %v202 = vsel %vm201, %v193, %v198
    %v203 = vrsqrt.pop %v146
    %v204 = vmul.f32 %v203, %v146
    %v205 = vmul.f32 %v204, %v203
    %v206 = vmul.f32 0.5, %v205
    %v207 = vsub.f32 1.5, %v206
    %v208 = vmul.f32 %v203, %v207
    %vm209 = vweird.f32 %v146
    %vm210 = vweird.f32 %v203
    %vm211 = vmor %vm209, %vm210
    %v212 = vsel %vm211, %v203, %v208
    %v213 = vrsqrt.pop %v149
    %v214 = vmul.f32 %v213, %v149
    %v215 = vmul.f32 %v214, %v213
    %v216 = vmul.f32 0.5, %v215
    %v217 = vsub.f32 1.5, %v216
    %v218 = vmul.f32 %v213, %v217
    %vm219 = vweird.f32 %v149
    %vm220 = vweird.f32 %v213
    %vm221 = vmor %vm219, %vm220
    %v222 = vsel %vm221, %v213, %v218
    %v223 = vrsqrt.pop %v152
    %v224 = vmul.f32 %v223, %v152
    %v225 = vmul.f32 %v224, %v223
    %v226 = vmul.f32 0.5, %v225
    %v227 = vsub.f32 1.5, %v226
    %v228 = vmul.f32 %v223, %v227
    %vm229 = vweird.f32 %v152
    %vm230 = vweird.f32 %v223
    %vm231 = vmor %vm229, %vm230
    %v232 = vsel %vm231, %v223, %v228
    %v233 = vmul.f32 %v112, %v162
    %v234 = vmul.f32 %v113, %v172
    %v235 = vmul.f32 %v114, %v182
    %v236 = vmul.f32 %v115, %v192
    %v237 = vmul.f32 %v116, %v202
    %v238 = vmul.f32 %v117, %v212
    %v239 = vmul.f32 %v118, %v222
    %v240 = vmul.f32 %v119, %v232
    %v249 = vlaneseq
    %v250 = vand.u32 %v249, 127
    %v251 = vperm.slane %v162, %v250
    %v252 = vadd.s32 %v250, 4294967288
    %v253 = vperm.slane %v172, %v252
    %vm254 = vcmask 130112
    %v255 = vsel %vm254, %v253, %v251
    %v256 = vperm.slane %v182, %v250
    %v257 = vperm.slane %v192, %v252
    %v258 = vsel %vm254, %v257, %v256
    %v259 = vperm.slane %v202, %v250
    %v260 = vperm.slane %v212, %v252
    %v261 = vsel %vm254, %v260, %v259
    %v262 = vperm.slane %v222, %v250
    %v263 = vperm.slane %v232, %v252
    %v264 = vsel %vm254, %v263, %v262
    %vm265 = vcmask 1042434
    %v266 = vsel %vm265, %v255, %v255
    %vm267 = vcmask 1043459
    %v268 = vsel %vm267, %v255, %v266
    %vm269 = vcmask 1044484
    %v270 = vsel %vm269, %v255, %v268
    %vm271 = vcmask 1045509
    %v272 = vsel %vm271, %v255, %v270
    %vm273 = vcmask 1046534
    %v274 = vsel %vm273, %v255, %v272
    %vm275 = vcmask 1047559
    %v276 = vsel %vm275, %v255, %v274
    %v277 = vsel %vm265, %v258, %v258
    %v278 = vsel %vm267, %v258, %v277
    %v279 = vsel %vm269, %v258, %v278
    %v280 = vsel %vm271, %v258, %v279
    %v281 = vsel %vm273, %v258, %v280
    %v282 = vsel %vm275, %v258, %v281
    %v283 = vsel %vm265, %v261, %v261
    %v284 = vsel %vm267, %v261, %v283
    %v285 = vsel %vm269, %v261, %v284
    %v286 = vsel %vm271, %v261, %v285
    %v287 = vsel %vm273, %v261, %v286
    %v288 = vsel %vm275, %v261, %v287
    %v289 = vsel %vm265, %v264, %v264
    %v290 = vsel %vm267, %v264, %v289
    %v291 = vsel %vm269, %v264, %v290
    %v292 = vsel %vm271, %v264, %v291
    %v293 = vsel %vm273, %v264, %v292
    %v294 = vsel %vm275, %v264, %v293
    %v299 = vmul.f32 %v233, %v276
    %v300 = vmul.f32 %v234, %v276
    %v301 = vmul.f32 %v235, %v282
    %v302 = vmul.f32 %v236, %v282
    %v303 = vmul.f32 %v237, %v288
    %v304 = vmul.f32 %v238, %v288
    %v305 = vmul.f32 %v239, %v294
    %v306 = vmul.f32 %v240, %v294
    %v308 = vsel %vm128, %v299, 0
    %v311 = vsel %vm128, %v300, 0
    %313 = vmatpush.msra.mxu0 0.0
    %314 = vmatpush.msra.mxu0 0.0
    %315 = vmatpush.msra.mxu0 0.0
    %316 = vmatpush.msra.mxu0 0.0
    %317 = vmatpush.msra.mxu0 0.0
    %318 = vmatpush.msra.mxu0 0.0
    %319 = vmatpush.msra.mxu0 0.0
    %320 = vmatpush.msra.mxu0 0.0
    %321 = vmatpush.msra.mxu0 0.0
    %322 = vmatpush.msra.mxu0 0.0
    %323 = vmatpush.msra.mxu0 0.0
    %324 = vmatpush.msra.mxu0 0.0
    %325 = vmatpush.msra.mxu0 0.0
    %326 = vmatpush.msra.mxu0 0.0
    %327 = vmatpush.msra.mxu0 %v121
    %328 = vmatpush.msra.mxu0 %v120
    %329 = vmatmul.f32.gmra.mxu0 %v308
    %v330 = vpop.f32.mrf.mxu0
    %v331 = vadd.f32 0.0, %v330
    %332 = vmatmul.f32.gmra.mxu0 %v311
    %v333 = vpop.f32.mrf.mxu0
    %v334 = vadd.f32 0.0, %v333
    %335 = vdwg.mxu0
    %v337 = vsel %vm128, %v301, 0
    %v340 = vsel %vm128, %v302, 0
    %342 = vmatpush.msra.mxu0 0.0
    %343 = vmatpush.msra.mxu0 0.0
    %344 = vmatpush.msra.mxu0 0.0
    %345 = vmatpush.msra.mxu0 0.0
    %346 = vmatpush.msra.mxu0 0.0
    %347 = vmatpush.msra.mxu0 0.0
    %348 = vmatpush.msra.mxu0 0.0
    %349 = vmatpush.msra.mxu0 0.0
    %350 = vmatpush.msra.mxu0 0.0
    %351 = vmatpush.msra.mxu0 0.0
    %352 = vmatpush.msra.mxu0 0.0
    %353 = vmatpush.msra.mxu0 0.0
    %354 = vmatpush.msra.mxu0 0.0
    %355 = vmatpush.msra.mxu0 0.0
    %356 = vmatpush.msra.mxu0 %v123
    %357 = vmatpush.msra.mxu0 %v122
    %358 = vmatmul.f32.gmra.mxu0 %v337
    %v359 = vpop.f32.mrf.mxu0
    %v360 = vadd.f32 0.0, %v359
    %361 = vmatmul.f32.gmra.mxu0 %v340
    %v362 = vpop.f32.mrf.mxu0
    %v363 = vadd.f32 0.0, %v362
    %364 = vdwg.mxu0
    %v366 = vsel %vm128, %v303, 0
    %v369 = vsel %vm128, %v304, 0
    %371 = vmatpush.msra.mxu0 0.0
    %372 = vmatpush.msra.mxu0 0.0
    %373 = vmatpush.msra.mxu0 0.0
    %374 = vmatpush.msra.mxu0 0.0
    %375 = vmatpush.msra.mxu0 0.0
    %376 = vmatpush.msra.mxu0 0.0
    %377 = vmatpush.msra.mxu0 0.0
    %378 = vmatpush.msra.mxu0 0.0
    %379 = vmatpush.msra.mxu0 0.0
    %380 = vmatpush.msra.mxu0 0.0
    %381 = vmatpush.msra.mxu0 0.0
    %382 = vmatpush.msra.mxu0 0.0
    %383 = vmatpush.msra.mxu0 0.0
    %384 = vmatpush.msra.mxu0 0.0
    %385 = vmatpush.msra.mxu0 %v125
    %386 = vmatpush.msra.mxu0 %v124
    %387 = vmatmul.f32.gmra.mxu0 %v366
    %v388 = vpop.f32.mrf.mxu0
    %v389 = vadd.f32 0.0, %v388
    %390 = vmatmul.f32.gmra.mxu0 %v369
    %v391 = vpop.f32.mrf.mxu0
    %v392 = vadd.f32 0.0, %v391
    %393 = vdwg.mxu0
    %v395 = vsel %vm128, %v305, 0
    %v398 = vsel %vm128, %v306, 0
    %400 = vmatpush.msra.mxu0 0.0
    %401 = vmatpush.msra.mxu0 0.0
    %402 = vmatpush.msra.mxu0 0.0
    %403 = vmatpush.msra.mxu0 0.0
    %404 = vmatpush.msra.mxu0 0.0
    %405 = vmatpush.msra.mxu0 0.0
    %406 = vmatpush.msra.mxu0 0.0
    %407 = vmatpush.msra.mxu0 0.0
    %408 = vmatpush.msra.mxu0 0.0
    %409 = vmatpush.msra.mxu0 0.0
    %410 = vmatpush.msra.mxu0 0.0
    %411 = vmatpush.msra.mxu0 0.0
    %412 = vmatpush.msra.mxu0 0.0
    %413 = vmatpush.msra.mxu0 0.0
    %414 = vmatpush.msra.mxu0 %v127
    %415 = vmatpush.msra.mxu0 %v126
    %416 = vmatmul.f32.gmra.mxu0 %v395
    %v417 = vpop.f32.mrf.mxu0
    %v418 = vadd.f32 0.0, %v417
    %419 = vmatmul.f32.gmra.mxu0 %v398
    %v420 = vpop.f32.mrf.mxu0
    %v421 = vadd.f32 0.0, %v420
    %422 = vdwg.mxu0
    %v424 = vsel %vm128, %v331, 0
    %v427 = vsel %vm128, %v334, 0
    %429 = vmatpush.xpose.msra.mxu0 0.0
    %430 = vmatpush.xpose.msra.mxu0 0.0
    %431 = vmatpush.xpose.msra.mxu0 0.0
    %432 = vmatpush.xpose.msra.mxu0 0.0
    %433 = vmatpush.xpose.msra.mxu0 0.0
    %434 = vmatpush.xpose.msra.mxu0 0.0
    %435 = vmatpush.xpose.msra.mxu0 0.0
    %436 = vmatpush.xpose.msra.mxu0 0.0
    %437 = vmatpush.xpose.msra.mxu0 0.0
    %438 = vmatpush.xpose.msra.mxu0 0.0
    %439 = vmatpush.xpose.msra.mxu0 0.0
    %440 = vmatpush.xpose.msra.mxu0 0.0
    %441 = vmatpush.xpose.msra.mxu0 0.0
    %442 = vmatpush.xpose.msra.mxu0 0.0
    %443 = vmatpush.xpose.msra.mxu0 %v311
    %444 = vmatpush.xpose.msra.mxu0 %v308
    %445 = vmatmul.f32.gmra.mxu0 %v424
    %v446 = vpop.f32.mrf.mxu0
    %v447 = vadd.f32 0.0, %v446
    %448 = vmatmul.f32.gmra.mxu0 %v427
    %v449 = vpop.f32.mrf.mxu0
    %v450 = vadd.f32 0.0, %v449
    %451 = vdwg.mxu0
    %v453 = vsel %vm128, %v360, 0
    %v456 = vsel %vm128, %v363, 0
    %458 = vmatpush.xpose.msra.mxu0 0.0
    %459 = vmatpush.xpose.msra.mxu0 0.0
    %460 = vmatpush.xpose.msra.mxu0 0.0
    %461 = vmatpush.xpose.msra.mxu0 0.0
    %462 = vmatpush.xpose.msra.mxu0 0.0
    %463 = vmatpush.xpose.msra.mxu0 0.0
    %464 = vmatpush.xpose.msra.mxu0 0.0
    %465 = vmatpush.xpose.msra.mxu0 0.0
    %466 = vmatpush.xpose.msra.mxu0 0.0
    %467 = vmatpush.xpose.msra.mxu0 0.0
    %468 = vmatpush.xpose.msra.mxu0 0.0
    %469 = vmatpush.xpose.msra.mxu0 0.0
    %470 = vmatpush.xpose.msra.mxu0 0.0
    %471 = vmatpush.xpose.msra.mxu0 0.0
    %472 = vmatpush.xpose.msra.mxu0 %v340
    %473 = vmatpush.xpose.msra.mxu0 %v337
    %474 = vmatmul.f32.gmra.mxu0 %v453
    %v475 = vpop.f32.mrf.mxu0
    %v476 = vadd.f32 0.0, %v475
    %477 = vmatmul.f32.gmra.mxu0 %v456
    %v478 = vpop.f32.mrf.mxu0
    %v479 = vadd.f32 0.0, %v478
    %480 = vdwg.mxu0
    %v482 = vsel %vm128, %v389, 0
    %v485 = vsel %vm128, %v392, 0
    %487 = vmatpush.xpose.msra.mxu0 0.0
    %488 = vmatpush.xpose.msra.mxu0 0.0
    %489 = vmatpush.xpose.msra.mxu0 0.0
    %490 = vmatpush.xpose.msra.mxu0 0.0
    %491 = vmatpush.xpose.msra.mxu0 0.0
    %492 = vmatpush.xpose.msra.mxu0 0.0
    %493 = vmatpush.xpose.msra.mxu0 0.0
    %494 = vmatpush.xpose.msra.mxu0 0.0
    %495 = vmatpush.xpose.msra.mxu0 0.0
    %496 = vmatpush.xpose.msra.mxu0 0.0
    %497 = vmatpush.xpose.msra.mxu0 0.0
    %498 = vmatpush.xpose.msra.mxu0 0.0
    %499 = vmatpush.xpose.msra.mxu0 0.0
    %500 = vmatpush.xpose.msra.mxu0 0.0
    %501 = vmatpush.xpose.msra.mxu0 %v369
    %502 = vmatpush.xpose.msra.mxu0 %v366
    %503 = vmatmul.f32.gmra.mxu0 %v482
    %v504 = vpop.f32.mrf.mxu0
    %v505 = vadd.f32 0.0, %v504
    %506 = vmatmul.f32.gmra.mxu0 %v485
    %v507 = vpop.f32.mrf.mxu0
    %v508 = vadd.f32 0.0, %v507
    %509 = vdwg.mxu0
    %v511 = vsel %vm128, %v418, 0
    %v514 = vsel %vm128, %v421, 0
    %516 = vmatpush.xpose.msra.mxu0 0.0
    %517 = vmatpush.xpose.msra.mxu0 0.0
    %518 = vmatpush.xpose.msra.mxu0 0.0
    %519 = vmatpush.xpose.msra.mxu0 0.0
    %520 = vmatpush.xpose.msra.mxu0 0.0
    %521 = vmatpush.xpose.msra.mxu0 0.0
    %522 = vmatpush.xpose.msra.mxu0 0.0
    %523 = vmatpush.xpose.msra.mxu0 0.0
    %524 = vmatpush.xpose.msra.mxu0 0.0
    %525 = vmatpush.xpose.msra.mxu0 0.0
    %526 = vmatpush.xpose.msra.mxu0 0.0
    %527 = vmatpush.xpose.msra.mxu0 0.0
    %528 = vmatpush.xpose.msra.mxu0 0.0
    %529 = vmatpush.xpose.msra.mxu0 0.0
    %530 = vmatpush.xpose.msra.mxu0 %v398
    %531 = vmatpush.xpose.msra.mxu0 %v395
    %532 = vmatmul.f32.gmra.mxu0 %v511
    %v533 = vpop.f32.mrf.mxu0
    %v534 = vadd.f32 0.0, %v533
    %535 = vmatmul.f32.gmra.mxu0 %v514
    %v536 = vpop.f32.mrf.mxu0
    %v537 = vadd.f32 0.0, %v536
    %538 = vdwg.mxu0
    %v539 = vld [vmem:[%s3] sm:$0x1]
    %v541 = vperm.slane %v539, 0
    %v543 = vmul.f32 %v112, %v541
    %v544 = vmul.f32 %v113, %v541
    %v545 = vmul.f32 %v114, %v541
    %v546 = vmul.f32 %v115, %v541
    %v547 = vmul.f32 %v116, %v541
    %v548 = vmul.f32 %v117, %v541
    %v549 = vmul.f32 %v118, %v541
    %v550 = vmul.f32 %v119, %v541
    %v551 = vld [vmem:[%s4] sm:$0x1]
    %v553 = vperm.slane %v551, 0
    %v555 = vmul.f32 %v447, %v553
    %v556 = vmul.f32 %v450, %v553
    %v557 = vmul.f32 %v476, %v553
    %v558 = vmul.f32 %v479, %v553
    %v559 = vmul.f32 %v505, %v553
    %v560 = vmul.f32 %v508, %v553
    %v561 = vmul.f32 %v534, %v553
    %v562 = vmul.f32 %v537, %v553
    %v563 = vadd.f32 %v543, %v555
    %v564 = vadd.f32 %v544, %v556
    %v565 = vadd.f32 %v545, %v557
    %v566 = vadd.f32 %v546, %v558
    %v567 = vadd.f32 %v547, %v559
    %v568 = vadd.f32 %v548, %v560
    %v569 = vadd.f32 %v549, %v561
    %v570 = vadd.f32 %v550, %v562
    %v571 = vsel %vm128, %v563, 0.0
    %572 = vadd.xlane.f32.xlu0 %v571
    %v573 = vpop.xlane.xlu0 %572
    %v574 = vsel %vm128, %v564, 0.0
    %575 = vadd.xlane.f32.xlu0 %v574
    %v576 = vpop.xlane.xlu0 %575
    %v577 = vsel %vm128, %v565, 0.0
    %578 = vadd.xlane.f32.xlu0 %v577
    %v579 = vpop.xlane.xlu0 %578
    %v580 = vsel %vm128, %v566, 0.0
    %581 = vadd.xlane.f32.xlu0 %v580
    %v582 = vpop.xlane.xlu0 %581
    %v583 = vsel %vm128, %v567, 0.0
    %584 = vadd.xlane.f32.xlu0 %v583
    %v585 = vpop.xlane.xlu0 %584
    %v586 = vsel %vm128, %v568, 0.0
    %587 = vadd.xlane.f32.xlu0 %v586
    %v588 = vpop.xlane.xlu0 %587
    %v589 = vsel %vm128, %v569, 0.0
    %590 = vadd.xlane.f32.xlu0 %v589
    %v591 = vpop.xlane.xlu0 %590
    %v592 = vsel %vm128, %v570, 0.0
    %593 = vadd.xlane.f32.xlu0 %v592
    %v594 = vpop.xlane.xlu0 %593
    %s595 = sld [smem:[#allocation2]]
    %v596 = vstv %s595
    %v597 = vadd.f32 %v573, %v596
    %v598 = vadd.f32 %v576, %v596
    %v599 = vadd.f32 %v579, %v596
    %v600 = vadd.f32 %v582, %v596
    %v601 = vadd.f32 %v585, %v596
    %v602 = vadd.f32 %v588, %v596
    %v603 = vadd.f32 %v591, %v596
    %v604 = vadd.f32 %v594, %v596
    %v605 = vxor.u32 %v597, 2147483648
    %v606 = vxor.u32 %v598, 2147483648
    %v607 = vxor.u32 %v599, 2147483648
    %v608 = vxor.u32 %v600, 2147483648
    %v609 = vxor.u32 %v601, 2147483648
    %v610 = vxor.u32 %v602, 2147483648
    %v611 = vxor.u32 %v603, 2147483648
    %v612 = vxor.u32 %v604, 2147483648
    %v613 = vmul.f32 %v605, 1.442695
    %v614 = vpow.pop %v613
    %v615 = vmul.f32 %v606, 1.442695
    %v616 = vpow.pop %v615
    %v617 = vmul.f32 %v607, 1.442695
    %v618 = vpow.pop %v617
    %v619 = vmul.f32 %v608, 1.442695
    %v620 = vpow.pop %v619
    %v621 = vmul.f32 %v609, 1.442695
    %v622 = vpow.pop %v621
    %v623 = vmul.f32 %v610, 1.442695
    %v624 = vpow.pop %v623
    %v625 = vmul.f32 %v611, 1.442695
    %v626 = vpow.pop %v625
    %v627 = vmul.f32 %v612, 1.442695
    %v628 = vpow.pop %v627
    %v629 = vadd.f32 %v614, 1.0
    %v630 = vadd.f32 %v616, 1.0
    %v631 = vadd.f32 %v618, 1.0
    %v632 = vadd.f32 %v620, 1.0
    %v633 = vadd.f32 %v622, 1.0
    %v634 = vadd.f32 %v624, 1.0
    %v635 = vadd.f32 %v626, 1.0
    %v636 = vadd.f32 %v628, 1.0
    %v637 = vrcp.pop %v629
    %v638 = vmul.f32 %v629, %v637
    %v639 = vsub.f32 1.0, %v638
    %v640 = vmul.f32 %v637, %v639
    %v641 = vadd.f32 %v637, %v640
    %vm642 = vweird.f32 %v629
    %vm643 = vweird.f32 %v637
    %vm644 = vmor %vm642, %vm643
    %v645 = vsel %vm644, %v637, %v641
    %v646 = vand.u32 2147483647, %v629
    %vm647 = vcmp.eq.f32.partialorder %v646, 8.507059e+37
    %v648 = vand.u32 %v629, 2147483648
    %v649 = vor.u32 1.1754944e-38, %v648
    %v650 = vsel %vm647, %v649, %v645
    %v651 = vmul.f32 1.0, %v650
    %v652 = vrcp.pop %v630
    %v653 = vmul.f32 %v630, %v652
    %v654 = vsub.f32 1.0, %v653
    %v655 = vmul.f32 %v652, %v654
    %v656 = vadd.f32 %v652, %v655
    %vm657 = vweird.f32 %v630
    %vm658 = vweird.f32 %v652
    %vm659 = vmor %vm657, %vm658
    %v660 = vsel %vm659, %v652, %v656
    %v661 = vand.u32 2147483647, %v630
    %vm662 = vcmp.eq.f32.partialorder %v661, 8.507059e+37
    %v663 = vand.u32 %v630, 2147483648
    %v664 = vor.u32 1.1754944e-38, %v663
    %v665 = vsel %vm662, %v664, %v660
    %v666 = vmul.f32 1.0, %v665
    %v667 = vrcp.pop %v631
    %v668 = vmul.f32 %v631, %v667
    %v669 = vsub.f32 1.0, %v668
    %v670 = vmul.f32 %v667, %v669
    %v671 = vadd.f32 %v667, %v670
    %vm672 = vweird.f32 %v631
    %vm673 = vweird.f32 %v667
    %vm674 = vmor %vm672, %vm673
    %v675 = vsel %vm674, %v667, %v671
    %v676 = vand.u32 2147483647, %v631
    %vm677 = vcmp.eq.f32.partialorder %v676, 8.507059e+37
    %v678 = vand.u32 %v631, 2147483648
    %v679 = vor.u32 1.1754944e-38, %v678
    %v680 = vsel %vm677, %v679, %v675
    %v681 = vmul.f32 1.0, %v680
    %v682 = vrcp.pop %v632
    %v683 = vmul.f32 %v632, %v682
    %v684 = vsub.f32 1.0, %v683
    %v685 = vmul.f32 %v682, %v684
    %v686 = vadd.f32 %v682, %v685
    %vm687 = vweird.f32 %v632
    %vm688 = vweird.f32 %v682
    %vm689 = vmor %vm687, %vm688
    %v690 = vsel %vm689, %v682, %v686
    %v691 = vand.u32 2147483647, %v632
    %vm692 = vcmp.eq.f32.partialorder %v691, 8.507059e+37
    %v693 = vand.u32 %v632, 2147483648
    %v694 = vor.u32 1.1754944e-38, %v693
    %v695 = vsel %vm692, %v694, %v690
    %v696 = vmul.f32 1.0, %v695
    %v697 = vrcp.pop %v633
    %v698 = vmul.f32 %v633, %v697
    %v699 = vsub.f32 1.0, %v698
    %v700 = vmul.f32 %v697, %v699
    %v701 = vadd.f32 %v697, %v700
    %vm702 = vweird.f32 %v633
    %vm703 = vweird.f32 %v697
    %vm704 = vmor %vm702, %vm703
    %v705 = vsel %vm704, %v697, %v701
    %v706 = vand.u32 2147483647, %v633
    %vm707 = vcmp.eq.f32.partialorder %v706, 8.507059e+37
    %v708 = vand.u32 %v633, 2147483648
    %v709 = vor.u32 1.1754944e-38, %v708
    %v710 = vsel %vm707, %v709, %v705
    %v711 = vmul.f32 1.0, %v710
    %v712 = vrcp.pop %v634
    %v713 = vmul.f32 %v634, %v712
    %v714 = vsub.f32 1.0, %v713
    %v715 = vmul.f32 %v712, %v714
    %v716 = vadd.f32 %v712, %v715
    %vm717 = vweird.f32 %v634
    %vm718 = vweird.f32 %v712
    %vm719 = vmor %vm717, %vm718
    %v720 = vsel %vm719, %v712, %v716
    %v721 = vand.u32 2147483647, %v634
    %vm722 = vcmp.eq.f32.partialorder %v721, 8.507059e+37
    %v723 = vand.u32 %v634, 2147483648
    %v724 = vor.u32 1.1754944e-38, %v723
    %v725 = vsel %vm722, %v724, %v720
    %v726 = vmul.f32 1.0, %v725
    %v727 = vrcp.pop %v635
    %v728 = vmul.f32 %v635, %v727
    %v729 = vsub.f32 1.0, %v728
    %v730 = vmul.f32 %v727, %v729
    %v731 = vadd.f32 %v727, %v730
    %vm732 = vweird.f32 %v635
    %vm733 = vweird.f32 %v727
    %vm734 = vmor %vm732, %vm733
    %v735 = vsel %vm734, %v727, %v731
    %v736 = vand.u32 2147483647, %v635
    %vm737 = vcmp.eq.f32.partialorder %v736, 8.507059e+37
    %v738 = vand.u32 %v635, 2147483648
    %v739 = vor.u32 1.1754944e-38, %v738
    %v740 = vsel %vm737, %v739, %v735
    %v741 = vmul.f32 1.0, %v740
    %v742 = vrcp.pop %v636
    %v743 = vmul.f32 %v636, %v742
    %v744 = vsub.f32 1.0, %v743
    %v745 = vmul.f32 %v742, %v744
    %v746 = vadd.f32 %v742, %v745
    %vm747 = vweird.f32 %v636
    %vm748 = vweird.f32 %v742
    %vm749 = vmor %vm747, %vm748
    %v750 = vsel %vm749, %v742, %v746
    %v751 = vand.u32 2147483647, %v636
    %vm752 = vcmp.eq.f32.partialorder %v751, 8.507059e+37
    %v753 = vand.u32 %v636, 2147483648
    %v754 = vor.u32 1.1754944e-38, %v753
    %v755 = vsel %vm752, %v754, %v750
    %v756 = vmul.f32 1.0, %v755
    %v757 = vmul.f32 %v651, %v447
    %v758 = vmul.f32 %v666, %v450
    %v759 = vmul.f32 %v681, %v476
    %v760 = vmul.f32 %v696, %v479
    %v761 = vmul.f32 %v711, %v505
    %v762 = vmul.f32 %v726, %v508
    %v763 = vmul.f32 %v741, %v534
    %v764 = vmul.f32 %v756, %v537
    %v765 = vsub.f32 1.0, %v651
    %v766 = vsub.f32 1.0, %v666
    %v767 = vsub.f32 1.0, %v681
    %v768 = vsub.f32 1.0, %v696
    %v769 = vsub.f32 1.0, %v711
    %v770 = vsub.f32 1.0, %v726
    %v771 = vsub.f32 1.0, %v741
    %v772 = vsub.f32 1.0, %v756
    %v773 = vmul.f32 %v765, %v112
    %v774 = vmul.f32 %v766, %v113
    %v775 = vmul.f32 %v767, %v114
    %v776 = vmul.f32 %v768, %v115
    %v777 = vmul.f32 %v769, %v116
    %v778 = vmul.f32 %v770, %v117
    %v779 = vmul.f32 %v771, %v118
    %v780 = vmul.f32 %v772, %v119
    %v781 = vadd.f32 %v757, %v773
    %v782 = vadd.f32 %v758, %v774
    %v783 = vadd.f32 %v759, %v775
    %v784 = vadd.f32 %v760, %v776
    %v785 = vadd.f32 %v761, %v777
    %v786 = vadd.f32 %v762, %v778
    %v787 = vadd.f32 %v763, %v779
    %v788 = vadd.f32 %v764, %v780
    %v789 = vld [vmem:[#allocation8] sm:$0xff]
    %v790 = vld [vmem:[#allocation8 + $0x8] sm:$0xff]
    %v791 = vld [vmem:[#allocation8 + $0x10] sm:$0xff]
    %v792 = vld [vmem:[#allocation8 + $0x18] sm:$0xff]
    %v793 = vld [vmem:[#allocation8 + $0x20] sm:$0xff]
    %v794 = vld [vmem:[#allocation8 + $0x28] sm:$0xff]
    %v795 = vld [vmem:[#allocation8 + $0x30] sm:$0xff]
    %v796 = vld [vmem:[#allocation8 + $0x38] sm:$0xff]
    %v797 = vld [vmem:[#allocation9] sm:$0xff]
    %v798 = vld [vmem:[#allocation9 + $0x8] sm:$0xff]
    %v799 = vld [vmem:[#allocation11] sm:$0xff]
    %v800 = vld [vmem:[#allocation11 + $0x8] sm:$0xff]
    %v802 = vsel %vm128, %v789, 0
    %v805 = vsel %vm128, %v790, 0
    %v808 = vsel %vm128, %v791, 0
    %v811 = vsel %vm128, %v792, 0
    %v814 = vsel %vm128, %v793, 0
    %v817 = vsel %vm128, %v794, 0
    %v820 = vsel %vm128, %v795, 0
    %v823 = vsel %vm128, %v796, 0
    %825 = vmatpush.msra.mxu0 0.0
    %826 = vmatpush.msra.mxu0 0.0
    %827 = vmatpush.msra.mxu0 0.0
    %828 = vmatpush.msra.mxu0 0.0
    %829 = vmatpush.msra.mxu0 0.0
    %830 = vmatpush.msra.mxu0 0.0
    %831 = vmatpush.msra.mxu0 0.0
    %832 = vmatpush.msra.mxu0 0.0
    %833 = vmatpush.msra.mxu0 0.0
    %834 = vmatpush.msra.mxu0 0.0
    %835 = vmatpush.msra.mxu0 0.0
    %836 = vmatpush.msra.mxu0 0.0
    %837 = vmatpush.msra.mxu0 0.0
    %838 = vmatpush.msra.mxu0 0.0
    %839 = vmatpush.msra.mxu0 %v800
    %840 = vmatpush.msra.mxu0 %v799
    %841 = vmatmul.f32.gmra.mxu0 %v802
    %v842 = vpop.f32.mrf.mxu0
    %v843 = vadd.f32 0.0, %v842
    %844 = vmatmul.f32.gmra.mxu0 %v805
    %v845 = vpop.f32.mrf.mxu0
    %v846 = vadd.f32 0.0, %v845
    %847 = vmatmul.f32.gmra.mxu0 %v808
    %v848 = vpop.f32.mrf.mxu0
    %v849 = vadd.f32 0.0, %v848
    %850 = vmatmul.f32.gmra.mxu0 %v811
    %v851 = vpop.f32.mrf.mxu0
    %v852 = vadd.f32 0.0, %v851
    %853 = vmatmul.f32.gmra.mxu0 %v814
    %v854 = vpop.f32.mrf.mxu0
    %v855 = vadd.f32 0.0, %v854
    %856 = vmatmul.f32.gmra.mxu0 %v817
    %v857 = vpop.f32.mrf.mxu0
    %v858 = vadd.f32 0.0, %v857
    %859 = vmatmul.f32.gmra.mxu0 %v820
    %v860 = vpop.f32.mrf.mxu0
    %v861 = vadd.f32 0.0, %v860
    %862 = vmatmul.f32.gmra.mxu0 %v823
    %v863 = vpop.f32.mrf.mxu0
    %v864 = vadd.f32 0.0, %v863
    %865 = vdwg.mxu0
    %v867 = vsel %vm128, %v781, 0
    %v870 = vsel %vm128, %v782, 0
    %v873 = vsel %vm128, %v783, 0
    %v876 = vsel %vm128, %v784, 0
    %v879 = vsel %vm128, %v785, 0
    %v882 = vsel %vm128, %v786, 0
    %v885 = vsel %vm128, %v787, 0
    %v888 = vsel %vm128, %v788, 0
    %890 = vmatpush.msra.mxu0 0.0
    %891 = vmatpush.msra.mxu0 0.0
    %892 = vmatpush.msra.mxu0 0.0
    %893 = vmatpush.msra.mxu0 0.0
    %894 = vmatpush.msra.mxu0 0.0
    %895 = vmatpush.msra.mxu0 0.0
    %896 = vmatpush.msra.mxu0 0.0
    %897 = vmatpush.msra.mxu0 0.0
    %898 = vmatpush.msra.mxu0 0.0
    %899 = vmatpush.msra.mxu0 0.0
    %900 = vmatpush.msra.mxu0 0.0
    %901 = vmatpush.msra.mxu0 0.0
    %902 = vmatpush.msra.mxu0 0.0
    %903 = vmatpush.msra.mxu0 0.0
    %904 = vmatpush.msra.mxu0 %v798
    %905 = vmatpush.msra.mxu0 %v797
    %906 = vmatmul.f32.gmra.mxu0 %v867
    %v907 = vpop.f32.mrf.mxu0
    %v908 = vadd.f32 %v843, %v907
    %909 = vmatmul.f32.gmra.mxu0 %v870
    %v910 = vpop.f32.mrf.mxu0
    %v911 = vadd.f32 %v846, %v910
    %912 = vmatmul.f32.gmra.mxu0 %v873
    %v913 = vpop.f32.mrf.mxu0
    %v914 = vadd.f32 %v849, %v913
    %915 = vmatmul.f32.gmra.mxu0 %v876
    %v916 = vpop.f32.mrf.mxu0
    %v917 = vadd.f32 %v852, %v916
    %918 = vmatmul.f32.gmra.mxu0 %v879
    %v919 = vpop.f32.mrf.mxu0
    %v920 = vadd.f32 %v855, %v919
    %921 = vmatmul.f32.gmra.mxu0 %v882
    %v922 = vpop.f32.mrf.mxu0
    %v923 = vadd.f32 %v858, %v922
    %924 = vmatmul.f32.gmra.mxu0 %v885
    %v925 = vpop.f32.mrf.mxu0
    %v926 = vadd.f32 %v861, %v925
    %927 = vmatmul.f32.gmra.mxu0 %v888
    %v928 = vpop.f32.mrf.mxu0
    %v929 = vadd.f32 %v864, %v928
    %930 = vdwg.mxu0
    %v931 = vld [vmem:[%s7] sm:$0x1]
    %v933 = vperm.slane %v931, 0
    %v935 = vadd.f32 %v908, %v933
    %v936 = vadd.f32 %v911, %v933
    %v937 = vadd.f32 %v914, %v933
    %v938 = vadd.f32 %v917, %v933
    %v939 = vadd.f32 %v920, %v933
    %v940 = vadd.f32 %v923, %v933
    %v941 = vadd.f32 %v926, %v933
    %v942 = vadd.f32 %v929, %v933
    %vm943 = vcmp.ge.f32.partialorder %v935, 0.0
    %vm944 = vcmp.ge.f32.partialorder %v936, 0.0
    %vm945 = vcmp.ge.f32.partialorder %v937, 0.0
    %vm946 = vcmp.ge.f32.partialorder %v938, 0.0
    %vm947 = vcmp.ge.f32.partialorder %v939, 0.0
    %vm948 = vcmp.ge.f32.partialorder %v940, 0.0
    %vm949 = vcmp.ge.f32.partialorder %v941, 0.0
    %vm950 = vcmp.ge.f32.partialorder %v942, 0.0
    %v951 = vmul.f32 %v935, 0.01
    %v952 = vmul.f32 %v936, 0.01
    %v953 = vmul.f32 %v937, 0.01
    %v954 = vmul.f32 %v938, 0.01
    %v955 = vmul.f32 %v939, 0.01
    %v956 = vmul.f32 %v940, 0.01
    %v957 = vmul.f32 %v941, 0.01
    %v958 = vmul.f32 %v942, 0.01
    %v959 = vsel %vm943, %v935, %v951
    %v960 = vsel %vm944, %v936, %v952
    %v961 = vsel %vm945, %v937, %v953
    %v962 = vsel %vm946, %v938, %v954
    %v963 = vsel %vm947, %v939, %v955
    %v964 = vsel %vm948, %v940, %v956
    %v965 = vsel %vm949, %v941, %v957
    %v966 = vsel %vm950, %v942, %v958
    %967 = vst [vmem:[#allocation12] sm:$0xff] %v959
    %968 = vst [vmem:[#allocation12 + $0x8] sm:$0xff] %v960
    %969 = vst [vmem:[#allocation12 + $0x10] sm:$0xff] %v961
    %970 = vst [vmem:[#allocation12 + $0x18] sm:$0xff] %v962
    %971 = vst [vmem:[#allocation12 + $0x20] sm:$0xff] %v963
    %972 = vst [vmem:[#allocation12 + $0x28] sm:$0xff] %v964
    %973 = vst [vmem:[#allocation12 + $0x30] sm:$0xff] %v965
    %974 = vst [vmem:[#allocation12 + $0x38] sm:$0xff] %v966
    // Predicated region
    $region58: #{tpu_custom_call.1} parent=1 // pred_check
      _
    $region59: #{tpu_custom_call.1} parent=1 // pred_check_branch
      %976 = sbr.rel (0) target = $region61
    $region60: #{tpu_custom_call.1} parent=1 // pred_region
      %978 = vsyncadd [#allocation5], 0
      %s979 = sshll.u32 [#allocation12], 4
      %s980 = int_to_ptr.vmem [resolvable:$true] %s979
      %s981 = sshll.u32 %s9, 4
      %s982 = int_to_ptr.hbm [resolvable:$true] %s981
      %987 = dma.vmem_to_hbm [thread:$0]  %s980, 1024, %s982, [#allocation5], 128, 128, 8
    $region61: #{tpu_custom_call.1} parent=1 // pred_fallthru
      _
    // Predicated region
    $region62: #{tpu_custom_call.1} parent=1 // pred_check
      _
    $region63: #{tpu_custom_call.1} parent=1 // pred_check_branch
      %989 = sbr.rel (0) target = $region65
    $region64: #{tpu_custom_call.1} parent=1 // pred_region
      %991 = dma.done [#allocation5], 1024
    $region65: #{tpu_custom_call.1} parent=1 // pred_fallthru
      _
    %992 = vsyncpa [#allocation4], 1
    %993 = vsyncpa [#allocation7], 1
    %994 = vsyncpa [#allocation10], 1
    %995 = vsyncpa [#allocation5], 1

</llo_original>
